<compile_context>
chip_gen: v6e
topology: v6e:2x2x1
jax: 0.10.0
libtpu: 0.0.40
codegen_flags: <defaults>
</compile_context>

<pallas_src>
import jax
import jax.numpy as jnp
import numpy as np
from jax import lax
from jax.experimental import pallas as pl
from jax.experimental.pallas import tpu as pltpu


def lstm_kernel(x_ref, wih_ref, whh_ref, b_ref, h_out_ref, xp_ref, h_scr, c_scr):
    """One (batch-shard, time-chunk) grid step of the LSTM recurrence.

    x_ref:   (Tc, Bp, E)   input chunk for this batch shard
    wih_ref: (E, 4H)       fused input->gates weights (columns = [i|f|g|o])
    whh_ref: (H, 4H)       fused hidden->gates weights
    b_ref:   (1, 4H)       fused bias (b_ih + b_hh)
    h_out:   (Bp, H)       final hidden state (written on the last time chunk)
    xp_ref:  (Tc, Bp, 4H)  VMEM scratch: hoisted input projection for this chunk
    h_scr:   (Bp, H)       h carry across time chunks
    c_scr:   (Bp, H)       c carry across time chunks
    """
    t_chunk = pl.program_id(1)
    Tc, Bp, E = x_ref.shape
    H4 = whh_ref.shape[1]
    H = H4 // 4

    # ---- init carry at the first time chunk of this batch shard ----
    @pl.when(t_chunk == 0)
    def _():
        h_scr[...] = jnp.zeros_like(h_scr)
        c_scr[...] = jnp.zeros_like(c_scr)

    # ---- Phase 1: hoisted, fused input projection for this chunk (no sequential dep) ----
    # Free view: Bp is a multiple of 8 sublanes (asserted in the wrapper), so merging
    # (Tc, Bp) -> Tc*Bp does not cross (8,128) tile boundaries. 4H output is lane-dense.
    x_all = x_ref[...].reshape(Tc * Bp, E)
    xp_ref[...] = (
        jnp.dot(x_all, wih_ref[...], preferred_element_type=jnp.float32) + b_ref[...]
    ).reshape(Tc, Bp, H4)

    # Only pin W_hh in vregs when small (<= 64 KiB = 16 vregs); at large H re-reading it
    # from VMEM each step is effectively free (3 vld slots/cycle) and avoids spills.
    hoist_whh = (H * H4 * 4) <= 64 * 1024
    w_hh_res = whh_ref[...] if hoist_whh else None

    # ---- Phase 2: sequential recurrence; only h @ W_hh + elementwise per step ----
    def step(t, carry):
        h_prev, c_prev = carry
        w_hh = w_hh_res if hoist_whh else whh_ref[...]
        gates = xp_ref[t] + jnp.dot(h_prev, w_hh, preferred_element_type=jnp.float32)
        # 3 EUP pushes per step: one sigmoid over the whole (Bp, 4H) tile, two tanh.
        sig = jax.nn.sigmoid(gates)
        i_g = sig[:, 0 * H:1 * H]
        f_g = sig[:, 1 * H:2 * H]
        o_g = sig[:, 3 * H:4 * H]
        g_g = jnp.tanh(gates[:, 2 * H:3 * H])
        c_new = f_g * c_prev + i_g * g_g
        h_new = o_g * jnp.tanh(c_new)
        return h_new, c_new

    # Capped unroll: full unroll only for short chunks.
    unroll = True if Tc <= 16 else 8
    h_n, c_n = lax.fori_loop(0, Tc, step, (h_scr[...], c_scr[...]), unroll=unroll)

    h_scr[...] = h_n
    c_scr[...] = c_n

    @pl.when(t_chunk == pl.num_programs(1) - 1)
    def _():
        h_out_ref[...] = h_n


def _largest_divisor_leq(n, cap):
    for c in range(min(n, cap), 0, -1):
        if n % c == 0:
            return c
    return 1


def simple_lstm_hidden(seq, weight_ih, weight_hh, bias_ih, bias_hh):
    """Pallas equivalent of simple_LSTM.forward: returns h_n of shape (1, B, H)."""
    seq = seq.astype(jnp.float32)            # mirrors seq.to(torch.float32)
    T, B, E = seq.shape
    H = weight_hh.shape[1]                   # weight_hh: (4H, H)
    H4 = 4 * H

    # Fused gate layout: (E, 4H), (H, 4H), (1, 4H); column blocks ordered [i|f|g|o].
    # Kept f32 so the 1e-5 reference check holds; cast x/W_ih to bf16 for large E/H on
    # v6e/v7x (MXU-only bf16; keep elementwise math f32, mandatory on v5e).
    w_ih_k = weight_ih.astype(jnp.float32).T                       # (E, 4H)
    w_hh_k = weight_hh.astype(jnp.float32).T                       # (H, 4H)
    b_k = (bias_ih + bias_hh).astype(jnp.float32).reshape(1, H4)   # (1, 4H)

    # --- batch-shard selection ---
    # Pad batch to a multiple of 8 sublanes; when B >= 16, produce >= 2 shards so the
    # "parallel" batch axis can fan out across TensorCores (2 TCs on v7x).
    B_pad = max(8, -(-B // 8) * 8)
    if B_pad >= 16:
        B_blk = min(128, -(-(B_pad // 2) // 8) * 8)
    else:
        B_blk = B_pad
    B_pad = -(-B_pad // B_blk) * B_blk
    assert B_blk % 8 == 0  # keeps the in-kernel (Tc,Bp,E)->(Tc*Bp,E) reshape a free view
    if B_pad != B:
        seq = jnp.pad(seq, ((0, 0), (0, B_pad - B), (0, 0)))

    # --- time chunking: VMEM is O(T_chunk), x DMA pipelines behind the recurrence ---
    T_chunk = _largest_divisor_leq(T, 32)
    n_t = T // T_chunk

    grid = (B_pad // B_blk, n_t)  # (batch shards [parallel], time chunks [arbitrary, last])

    h_pad = pl.pallas_call(
        lstm_kernel,
        out_shape=jax.ShapeDtypeStruct((B_pad, H), jnp.float32),
        grid_spec=pltpu.PrefetchScalarGridSpec(
            num_scalar_prefetch=0,
            grid=grid,
            in_specs=[
                pl.BlockSpec((T_chunk, B_blk, E), lambda b, t: (t, b, 0)),  # x chunk
                # Constant-index weights stay resident across the grid; at realistic E/H
                # on v7x consider pipeline_mode=pl.Buffered(1) to drop the 2nd buffer.
                pl.BlockSpec((E, H4), lambda b, t: (0, 0)),
                pl.BlockSpec((H, H4), lambda b, t: (0, 0)),
                pl.BlockSpec((1, H4), lambda b, t: (0, 0)),
            ],
            out_specs=pl.BlockSpec((B_blk, H), lambda b, t: (b, 0)),
            scratch_shapes=[
                pltpu.VMEM((T_chunk, B_blk, H4), jnp.float32),  # per-chunk x-projection
                pltpu.VMEM((B_blk, H), jnp.float32),            # h carry
                pltpu.VMEM((B_blk, H), jnp.float32),            # c carry
            ],
        ),
        compiler_params=pltpu.CompilerParams(
            dimension_semantics=("parallel", "arbitrary"),  # batch shards || , time serial
            vmem_limit_bytes=32 * 1024 * 1024,              # explicit, safe on v5e/v6e/v7x
        ),
    )(seq, w_ih_k, w_hh_k, b_k)

    return h_pad[:B][None]  # (1, B, H)


def lstm_reference(seq, weight_ih, weight_hh, bias_ih, bias_hh):
    """Pure-JAX reference implementing PyTorch nn.LSTM (1 layer, zero initial state)."""
    seq = seq.astype(jnp.float32)
    T, B, E = seq.shape
    H = weight_hh.shape[1]
    b = bias_ih + bias_hh

    def step(carry, x_t):
        h, c = carry
        gates = x_t @ weight_ih.T + h @ weight_hh.T + b  # (B, 4H)
        i = jax.nn.sigmoid(gates[:, 0 * H:1 * H])
        f = jax.nn.sigmoid(gates[:, 1 * H:2 * H])
        g = jnp.tanh(gates[:, 2 * H:3 * H])
        o = jax.nn.sigmoid(gates[:, 3 * H:4 * H])
        c = f * c + i * g
        h = o * jnp.tanh(c)
        return (h, c), None

    h0 = jnp.zeros((B, H), jnp.float32)
    c0 = jnp.zeros((B, H), jnp.float32)
    (h_n, _), _ = lax.scan(step, (h0, c0), seq)
    return h_n[None]  # (1, B, H)


if __name__ == "__main__":
    T, B, E, H = 8, 2, 16, 32   # seq_len, batch, embedding_dim, hidden_size

    key = jax.random.PRNGKey(0)
    k_seq, k_wih, k_whh, k_bih, k_bhh = jax.random.split(key, 5)

    # PyTorch nn.LSTM init: uniform(-1/sqrt(H), 1/sqrt(H)), shapes (4H,E),(4H,H),(4H,),(4H,)
    bound = 1.0 / np.sqrt(H)
    weight_ih = jax.random.uniform(k_wih, (4 * H, E), jnp.float32, -bound, bound)
    weight_hh = jax.random.uniform(k_whh, (4 * H, H), jnp.float32, -bound, bound)
    bias_ih = jax.random.uniform(k_bih, (4 * H,), jnp.float32, -bound, bound)
    bias_hh = jax.random.uniform(k_bhh, (4 * H,), jnp.float32, -bound, bound)

    seq = jax.random.normal(k_seq, (T, B, E), jnp.float32)

    hidden = simple_lstm_hidden(seq, weight_ih, weight_hh, bias_ih, bias_hh)
    hidden = jax.block_until_ready(hidden)

    ref = lstm_reference(seq, weight_ih, weight_hh, bias_ih, bias_hh)
    assert hidden.shape == (1, B, H), hidden.shape
    np.testing.assert_allclose(np.asarray(hidden), np.asarray(ref), rtol=1e-5, atol=1e-5)

    print("KERNEL_OK")
</pallas_src>

<mosaic_0001>
module attributes {stable_mosaic.version = 11 : i64} {
  func.func @lstm_kernel(%arg0: i32, %arg1: i32, %arg2: memref<8x8x16xf32, #tpu.memory_space<vmem>>, %arg3: memref<16x128xf32, #tpu.memory_space<vmem>>, %arg4: memref<32x128xf32, #tpu.memory_space<vmem>>, %arg5: memref<1x128xf32, #tpu.memory_space<vmem>>, %arg6: memref<8x32xf32, #tpu.memory_space<vmem>>, %arg7: memref<8x8x128xf32, #tpu.memory_space<vmem>>, %arg8: memref<8x32xf32, #tpu.memory_space<vmem>>, %arg9: memref<8x32xf32, #tpu.memory_space<vmem>>) attributes {dimension_semantics = [#tpu.dimension_semantics<parallel>, #tpu.dimension_semantics<arbitrary>], iteration_bounds = array<i64: 1, 1>, scalar_prefetch = 0 : i64, scratch_operands = 3 : i64, tpu.core_type = #tpu.core_type<tc>, window_params = [{transform_indices = @transform_0, window_bounds = array<i64: 8, 8, 16>}, {pipeline_mode = #tpu.pipeline_mode<synchronous>, transform_indices = @transform_1, window_bounds = array<i64: 16, 128>}, {pipeline_mode = #tpu.pipeline_mode<synchronous>, transform_indices = @transform_2, window_bounds = array<i64: 32, 128>}, {pipeline_mode = #tpu.pipeline_mode<synchronous>, transform_indices = @transform_3, window_bounds = array<i64: 1, 128>}, {transform_indices = @transform_4, window_bounds = array<i64: 8, 32>}]} {
    %c0_i32 = arith.constant 0 : i32
    %0 = arith.cmpi eq, %arg1, %c0_i32 : i32
    %1 = arith.extui %0 : i1 to i32
    %c0_i32_0 = arith.constant 0 : i32
    %2 = arith.cmpi ne, %1, %c0_i32_0 : i32
    scf.if %2 {
      %cst_55 = arith.constant 0.000000e+00 : f32
      %180 = vector.broadcast %cst_55 : f32 to vector<8x32xf32>
      %c0_56 = arith.constant 0 : index
      %c0_57 = arith.constant 0 : index
      %181 = vector.load %arg8[%c0_56, %c0_57] : memref<8x32xf32, #tpu.memory_space<vmem>>, vector<8x32xf32>
      tpu.vector_store %arg8[%c0_56, %c0_57], %180 {strides = array<i32>} : memref<8x32xf32, #tpu.memory_space<vmem>>, vector<8x32xf32>,
      %cst_58 = arith.constant 0.000000e+00 : f32
      %182 = vector.broadcast %cst_58 : f32 to vector<8x32xf32>
      %c0_59 = arith.constant 0 : index
      %c0_60 = arith.constant 0 : index
      %183 = vector.load %arg9[%c0_59, %c0_60] : memref<8x32xf32, #tpu.memory_space<vmem>>, vector<8x32xf32>
      tpu.vector_store %arg9[%c0_59, %c0_60], %182 {strides = array<i32>} : memref<8x32xf32, #tpu.memory_space<vmem>>, vector<8x32xf32>,
    } else {
    }
    %c0 = arith.constant 0 : index
    %c0_1 = arith.constant 0 : index
    %c0_2 = arith.constant 0 : index
    %3 = vector.load %arg2[%c0, %c0_1, %c0_2] : memref<8x8x16xf32, #tpu.memory_space<vmem>>, vector<8x8x16xf32>
    %4 = vector.shape_cast %3 : vector<8x8x16xf32> to vector<64x16xf32>
    %c0_3 = arith.constant 0 : index
    %c0_4 = arith.constant 0 : index
    %5 = vector.load %arg3[%c0_3, %c0_4] : memref<16x128xf32, #tpu.memory_space<vmem>>, vector<16x128xf32>
    %cst = arith.constant dense<0.000000e+00> : vector<64x128xf32>
    %6 = tpu.matmul %4, %5, %cst {dimension_numbers = #tpu.dot_dimension_numbers<[1], [0], [0], [1], [0, 0, 1, 1], [], []>} : vector<64x16xf32>, vector<16x128xf32>, vector<64x128xf32> -> vector<64x128xf32>
    %c0_5 = arith.constant 0 : index
    %c0_6 = arith.constant 0 : index
    %7 = vector.load %arg5[%c0_5, %c0_6] : memref<1x128xf32, #tpu.memory_space<vmem>>, vector<1x128xf32>
    %8 = vector.broadcast %7 : vector<1x128xf32> to vector<64x128xf32>
    %9 = arith.addf %6, %8 : vector<64x128xf32>
    %10 = vector.shape_cast %9 : vector<64x128xf32> to vector<8x8x128xf32>
    %c0_7 = arith.constant 0 : index
    %c0_8 = arith.constant 0 : index
    %c0_9 = arith.constant 0 : index
    %11 = vector.load %arg7[%c0_7, %c0_8, %c0_9] : memref<8x8x128xf32, #tpu.memory_space<vmem>>, vector<8x8x128xf32>
    tpu.vector_store %arg7[%c0_7, %c0_8, %c0_9], %10 {strides = array<i32>} : memref<8x8x128xf32, #tpu.memory_space<vmem>>, vector<8x8x128xf32>,
    %c0_10 = arith.constant 0 : index
    %c0_11 = arith.constant 0 : index
    %12 = vector.load %arg4[%c0_10, %c0_11] : memref<32x128xf32, #tpu.memory_space<vmem>>, vector<32x128xf32>
    %c0_12 = arith.constant 0 : index
    %c0_13 = arith.constant 0 : index
    %13 = vector.load %arg8[%c0_12, %c0_13] : memref<8x32xf32, #tpu.memory_space<vmem>>, vector<8x32xf32>
    %c0_14 = arith.constant 0 : index
    %c0_15 = arith.constant 0 : index
    %14 = vector.load %arg9[%c0_14, %c0_15] : memref<8x32xf32, #tpu.memory_space<vmem>>, vector<8x32xf32>
    %c0_i32_16 = arith.constant 0 : i32
    %15 = arith.index_cast %c0_i32_16 : i32 to index
    %c0_17 = arith.constant 0 : index
    %c0_18 = arith.constant 0 : index
    %16 = vector.load %arg7[%15, %c0_17, %c0_18] : memref<8x8x128xf32, #tpu.memory_space<vmem>>, vector<1x8x128xf32>
    %17 = vector.shape_cast %16 : vector<1x8x128xf32> to vector<8x128xf32>
    %cst_19 = arith.constant dense<0.000000e+00> : vector<8x128xf32>
    %18 = tpu.matmul %13, %12, %cst_19 {dimension_numbers = #tpu.dot_dimension_numbers<[1], [0], [0], [1], [0, 0, 1, 1], [], []>} : vector<8x32xf32>, vector<32x128xf32>, vector<8x128xf32> -> vector<8x128xf32>
    %19 = arith.addf %17, %18 : vector<8x128xf32>
    %20 = arith.negf %19 : vector<8x128xf32>
    %21 = math.exp %20 : vector<8x128xf32>
    %cst_20 = arith.constant 1.000000e+00 : f32
    %22 = vector.broadcast %cst_20 : f32 to vector<8x128xf32>
    %23 = arith.addf %22, %21 : vector<8x128xf32>
    %24 = arith.divf %22, %23 : vector<8x128xf32>
    %25 = vector.extract_strided_slice %24 {offsets = [0, 0], sizes = [8, 32], strides = [1, 1]} : vector<8x128xf32> to vector<8x32xf32>
    %26 = vector.extract_strided_slice %24 {offsets = [0, 32], sizes = [8, 32], strides = [1, 1]} : vector<8x128xf32> to vector<8x32xf32>
    %27 = vector.extract_strided_slice %24 {offsets = [0, 96], sizes = [8, 32], strides = [1, 1]} : vector<8x128xf32> to vector<8x32xf32>
    %28 = vector.extract_strided_slice %19 {offsets = [0, 64], sizes = [8, 32], strides = [1, 1]} : vector<8x128xf32> to vector<8x32xf32>
    %29 = math.tanh %28 : vector<8x32xf32>
    %30 = arith.mulf %26, %14 : vector<8x32xf32>
    %31 = arith.mulf %25, %29 : vector<8x32xf32>
    %32 = arith.addf %30, %31 : vector<8x32xf32>
    %33 = math.tanh %32 : vector<8x32xf32>
    %34 = arith.mulf %27, %33 : vector<8x32xf32>
    %c1_i32 = arith.constant 1 : i32
    %35 = arith.index_cast %c1_i32 : i32 to index
    %c0_21 = arith.constant 0 : index
    %c0_22 = arith.constant 0 : index
    %36 = vector.load %arg7[%35, %c0_21, %c0_22] : memref<8x8x128xf32, #tpu.memory_space<vmem>>, vector<1x8x128xf32>
    %37 = vector.shape_cast %36 : vector<1x8x128xf32> to vector<8x128xf32>
    %cst_23 = arith.constant dense<0.000000e+00> : vector<8x128xf32>
    %38 = tpu.matmul %34, %12, %cst_23 {dimension_numbers = #tpu.dot_dimension_numbers<[1], [0], [0], [1], [0, 0, 1, 1], [], []>} : vector<8x32xf32>, vector<32x128xf32>, vector<8x128xf32> -> vector<8x128xf32>
    %39 = arith.addf %37, %38 : vector<8x128xf32>
    %40 = arith.negf %39 : vector<8x128xf32>
    %41 = math.exp %40 : vector<8x128xf32>
    %cst_24 = arith.constant 1.000000e+00 : f32
    %42 = vector.broadcast %cst_24 : f32 to vector<8x128xf32>
    %43 = arith.addf %42, %41 : vector<8x128xf32>
    %44 = arith.divf %42, %43 : vector<8x128xf32>
    %45 = vector.extract_strided_slice %44 {offsets = [0, 0], sizes = [8, 32], strides = [1, 1]} : vector<8x128xf32> to vector<8x32xf32>
    %46 = vector.extract_strided_slice %44 {offsets = [0, 32], sizes = [8, 32], strides = [1, 1]} : vector<8x128xf32> to vector<8x32xf32>
    %47 = vector.extract_strided_slice %44 {offsets = [0, 96], sizes = [8, 32], strides = [1, 1]} : vector<8x128xf32> to vector<8x32xf32>
    %48 = vector.extract_strided_slice %39 {offsets = [0, 64], sizes = [8, 32], strides = [1, 1]} : vector<8x128xf32> to vector<8x32xf32>
    %49 = math.tanh %48 : vector<8x32xf32>
    %50 = arith.mulf %46, %32 : vector<8x32xf32>
    %51 = arith.mulf %45, %49 : vector<8x32xf32>
    %52 = arith.addf %50, %51 : vector<8x32xf32>
    %53 = math.tanh %52 : vector<8x32xf32>
    %54 = arith.mulf %47, %53 : vector<8x32xf32>
    %c2_i32 = arith.constant 2 : i32
    %55 = arith.index_cast %c2_i32 : i32 to index
    %c0_25 = arith.constant 0 : index
    %c0_26 = arith.constant 0 : index
    %56 = vector.load %arg7[%55, %c0_25, %c0_26] : memref<8x8x128xf32, #tpu.memory_space<vmem>>, vector<1x8x128xf32>
    %57 = vector.shape_cast %56 : vector<1x8x128xf32> to vector<8x128xf32>
    %cst_27 = arith.constant dense<0.000000e+00> : vector<8x128xf32>
    %58 = tpu.matmul %54, %12, %cst_27 {dimension_numbers = #tpu.dot_dimension_numbers<[1], [0], [0], [1], [0, 0, 1, 1], [], []>} : vector<8x32xf32>, vector<32x128xf32>, vector<8x128xf32> -> vector<8x128xf32>
    %59 = arith.addf %57, %58 : vector<8x128xf32>
    %60 = arith.negf %59 : vector<8x128xf32>
    %61 = math.exp %60 : vector<8x128xf32>
    %cst_28 = arith.constant 1.000000e+00 : f32
    %62 = vector.broadcast %cst_28 : f32 to vector<8x128xf32>
    %63 = arith.addf %62, %61 : vector<8x128xf32>
    %64 = arith.divf %62, %63 : vector<8x128xf32>
    %65 = vector.extract_strided_slice %64 {offsets = [0, 0], sizes = [8, 32], strides = [1, 1]} : vector<8x128xf32> to vector<8x32xf32>
    %66 = vector.extract_strided_slice %64 {offsets = [0, 32], sizes = [8, 32], strides = [1, 1]} : vector<8x128xf32> to vector<8x32xf32>
    %67 = vector.extract_strided_slice %64 {offsets = [0, 96], sizes = [8, 32], strides = [1, 1]} : vector<8x128xf32> to vector<8x32xf32>
    %68 = vector.extract_strided_slice %59 {offsets = [0, 64], sizes = [8, 32], strides = [1, 1]} : vector<8x128xf32> to vector<8x32xf32>
    %69 = math.tanh %68 : vector<8x32xf32>
    %70 = arith.mulf %66, %52 : vector<8x32xf32>
    %71 = arith.mulf %65, %69 : vector<8x32xf32>
    %72 = arith.addf %70, %71 : vector<8x32xf32>
    %73 = math.tanh %72 : vector<8x32xf32>
    %74 = arith.mulf %67, %73 : vector<8x32xf32>
    %c3_i32 = arith.constant 3 : i32
    %75 = arith.index_cast %c3_i32 : i32 to index
    %c0_29 = arith.constant 0 : index
    %c0_30 = arith.constant 0 : index
    %76 = vector.load %arg7[%75, %c0_29, %c0_30] : memref<8x8x128xf32, #tpu.memory_space<vmem>>, vector<1x8x128xf32>
    %77 = vector.shape_cast %76 : vector<1x8x128xf32> to vector<8x128xf32>
    %cst_31 = arith.constant dense<0.000000e+00> : vector<8x128xf32>
    %78 = tpu.matmul %74, %12, %cst_31 {dimension_numbers = #tpu.dot_dimension_numbers<[1], [0], [0], [1], [0, 0, 1, 1], [], []>} : vector<8x32xf32>, vector<32x128xf32>, vector<8x128xf32> -> vector<8x128xf32>
    %79 = arith.addf %77, %78 : vector<8x128xf32>
    %80 = arith.negf %79 : vector<8x128xf32>
    %81 = math.exp %80 : vector<8x128xf32>
    %cst_32 = arith.constant 1.000000e+00 : f32
    %82 = vector.broadcast %cst_32 : f32 to vector<8x128xf32>
    %83 = arith.addf %82, %81 : vector<8x128xf32>
    %84 = arith.divf %82, %83 : vector<8x128xf32>
    %85 = vector.extract_strided_slice %84 {offsets = [0, 0], sizes = [8, 32], strides = [1, 1]} : vector<8x128xf32> to vector<8x32xf32>
    %86 = vector.extract_strided_slice %84 {offsets = [0, 32], sizes = [8, 32], strides = [1, 1]} : vector<8x128xf32> to vector<8x32xf32>
    %87 = vector.extract_strided_slice %84 {offsets = [0, 96], sizes = [8, 32], strides = [1, 1]} : vector<8x128xf32> to vector<8x32xf32>
    %88 = vector.extract_strided_slice %79 {offsets = [0, 64], sizes = [8, 32], strides = [1, 1]} : vector<8x128xf32> to vector<8x32xf32>
    %89 = math.tanh %88 : vector<8x32xf32>
    %90 = arith.mulf %86, %72 : vector<8x32xf32>
    %91 = arith.mulf %85, %89 : vector<8x32xf32>
    %92 = arith.addf %90, %91 : vector<8x32xf32>
    %93 = math.tanh %92 : vector<8x32xf32>
    %94 = arith.mulf %87, %93 : vector<8x32xf32>
    %c4_i32 = arith.constant 4 : i32
    %95 = arith.index_cast %c4_i32 : i32 to index
    %c0_33 = arith.constant 0 : index
    %c0_34 = arith.constant 0 : index
    %96 = vector.load %arg7[%95, %c0_33, %c0_34] : memref<8x8x128xf32, #tpu.memory_space<vmem>>, vector<1x8x128xf32>
    %97 = vector.shape_cast %96 : vector<1x8x128xf32> to vector<8x128xf32>
    %cst_35 = arith.constant dense<0.000000e+00> : vector<8x128xf32>
    %98 = tpu.matmul %94, %12, %cst_35 {dimension_numbers = #tpu.dot_dimension_numbers<[1], [0], [0], [1], [0, 0, 1, 1], [], []>} : vector<8x32xf32>, vector<32x128xf32>, vector<8x128xf32> -> vector<8x128xf32>
    %99 = arith.addf %97, %98 : vector<8x128xf32>
    %100 = arith.negf %99 : vector<8x128xf32>
    %101 = math.exp %100 : vector<8x128xf32>
    %cst_36 = arith.constant 1.000000e+00 : f32
    %102 = vector.broadcast %cst_36 : f32 to vector<8x128xf32>
    %103 = arith.addf %102, %101 : vector<8x128xf32>
    %104 = arith.divf %102, %103 : vector<8x128xf32>
    %105 = vector.extract_strided_slice %104 {offsets = [0, 0], sizes = [8, 32], strides = [1, 1]} : vector<8x128xf32> to vector<8x32xf32>
    %106 = vector.extract_strided_slice %104 {offsets = [0, 32], sizes = [8, 32], strides = [1, 1]} : vector<8x128xf32> to vector<8x32xf32>
    %107 = vector.extract_strided_slice %104 {offsets = [0, 96], sizes = [8, 32], strides = [1, 1]} : vector<8x128xf32> to vector<8x32xf32>
    %108 = vector.extract_strided_slice %99 {offsets = [0, 64], sizes = [8, 32], strides = [1, 1]} : vector<8x128xf32> to vector<8x32xf32>
    %109 = math.tanh %108 : vector<8x32xf32>
    %110 = arith.mulf %106, %92 : vector<8x32xf32>
    %111 = arith.mulf %105, %109 : vector<8x32xf32>
    %112 = arith.addf %110, %111 : vector<8x32xf32>
    %113 = math.tanh %112 : vector<8x32xf32>
    %114 = arith.mulf %107, %113 : vector<8x32xf32>
    %c5_i32 = arith.constant 5 : i32
    %115 = arith.index_cast %c5_i32 : i32 to index
    %c0_37 = arith.constant 0 : index
    %c0_38 = arith.constant 0 : index
    %116 = vector.load %arg7[%115, %c0_37, %c0_38] : memref<8x8x128xf32, #tpu.memory_space<vmem>>, vector<1x8x128xf32>
    %117 = vector.shape_cast %116 : vector<1x8x128xf32> to vector<8x128xf32>
    %cst_39 = arith.constant dense<0.000000e+00> : vector<8x128xf32>
    %118 = tpu.matmul %114, %12, %cst_39 {dimension_numbers = #tpu.dot_dimension_numbers<[1], [0], [0], [1], [0, 0, 1, 1], [], []>} : vector<8x32xf32>, vector<32x128xf32>, vector<8x128xf32> -> vector<8x128xf32>
    %119 = arith.addf %117, %118 : vector<8x128xf32>
    %120 = arith.negf %119 : vector<8x128xf32>
    %121 = math.exp %120 : vector<8x128xf32>
    %cst_40 = arith.constant 1.000000e+00 : f32
    %122 = vector.broadcast %cst_40 : f32 to vector<8x128xf32>
    %123 = arith.addf %122, %121 : vector<8x128xf32>
    %124 = arith.divf %122, %123 : vector<8x128xf32>
    %125 = vector.extract_strided_slice %124 {offsets = [0, 0], sizes = [8, 32], strides = [1, 1]} : vector<8x128xf32> to vector<8x32xf32>
    %126 = vector.extract_strided_slice %124 {offsets = [0, 32], sizes = [8, 32], strides = [1, 1]} : vector<8x128xf32> to vector<8x32xf32>
    %127 = vector.extract_strided_slice %124 {offsets = [0, 96], sizes = [8, 32], strides = [1, 1]} : vector<8x128xf32> to vector<8x32xf32>
    %128 = vector.extract_strided_slice %119 {offsets = [0, 64], sizes = [8, 32], strides = [1, 1]} : vector<8x128xf32> to vector<8x32xf32>
    %129 = math.tanh %128 : vector<8x32xf32>
    %130 = arith.mulf %126, %112 : vector<8x32xf32>
    %131 = arith.mulf %125, %129 : vector<8x32xf32>
    %132 = arith.addf %130, %131 : vector<8x32xf32>
    %133 = math.tanh %132 : vector<8x32xf32>
    %134 = arith.mulf %127, %133 : vector<8x32xf32>
    %c6_i32 = arith.constant 6 : i32
    %135 = arith.index_cast %c6_i32 : i32 to index
    %c0_41 = arith.constant 0 : index
    %c0_42 = arith.constant 0 : index
    %136 = vector.load %arg7[%135, %c0_41, %c0_42] : memref<8x8x128xf32, #tpu.memory_space<vmem>>, vector<1x8x128xf32>
    %137 = vector.shape_cast %136 : vector<1x8x128xf32> to vector<8x128xf32>
    %cst_43 = arith.constant dense<0.000000e+00> : vector<8x128xf32>
    %138 = tpu.matmul %134, %12, %cst_43 {dimension_numbers = #tpu.dot_dimension_numbers<[1], [0], [0], [1], [0, 0, 1, 1], [], []>} : vector<8x32xf32>, vector<32x128xf32>, vector<8x128xf32> -> vector<8x128xf32>
    %139 = arith.addf %137, %138 : vector<8x128xf32>
    %140 = arith.negf %139 : vector<8x128xf32>
    %141 = math.exp %140 : vector<8x128xf32>
    %cst_44 = arith.constant 1.000000e+00 : f32
    %142 = vector.broadcast %cst_44 : f32 to vector<8x128xf32>
    %143 = arith.addf %142, %141 : vector<8x128xf32>
    %144 = arith.divf %142, %143 : vector<8x128xf32>
    %145 = vector.extract_strided_slice %144 {offsets = [0, 0], sizes = [8, 32], strides = [1, 1]} : vector<8x128xf32> to vector<8x32xf32>
    %146 = vector.extract_strided_slice %144 {offsets = [0, 32], sizes = [8, 32], strides = [1, 1]} : vector<8x128xf32> to vector<8x32xf32>
    %147 = vector.extract_strided_slice %144 {offsets = [0, 96], sizes = [8, 32], strides = [1, 1]} : vector<8x128xf32> to vector<8x32xf32>
    %148 = vector.extract_strided_slice %139 {offsets = [0, 64], sizes = [8, 32], strides = [1, 1]} : vector<8x128xf32> to vector<8x32xf32>
    %149 = math.tanh %148 : vector<8x32xf32>
    %150 = arith.mulf %146, %132 : vector<8x32xf32>
    %151 = arith.mulf %145, %149 : vector<8x32xf32>
    %152 = arith.addf %150, %151 : vector<8x32xf32>
    %153 = math.tanh %152 : vector<8x32xf32>
    %154 = arith.mulf %147, %153 : vector<8x32xf32>
    %c7_i32 = arith.constant 7 : i32
    %155 = arith.index_cast %c7_i32 : i32 to index
    %c0_45 = arith.constant 0 : index
    %c0_46 = arith.constant 0 : index
    %156 = vector.load %arg7[%155, %c0_45, %c0_46] : memref<8x8x128xf32, #tpu.memory_space<vmem>>, vector<1x8x128xf32>
    %157 = vector.shape_cast %156 : vector<1x8x128xf32> to vector<8x128xf32>
    %cst_47 = arith.constant dense<0.000000e+00> : vector<8x128xf32>
    %158 = tpu.matmul %154, %12, %cst_47 {dimension_numbers = #tpu.dot_dimension_numbers<[1], [0], [0], [1], [0, 0, 1, 1], [], []>} : vector<8x32xf32>, vector<32x128xf32>, vector<8x128xf32> -> vector<8x128xf32>
    %159 = arith.addf %157, %158 : vector<8x128xf32>
    %160 = arith.negf %159 : vector<8x128xf32>
    %161 = math.exp %160 : vector<8x128xf32>
    %cst_48 = arith.constant 1.000000e+00 : f32
    %162 = vector.broadcast %cst_48 : f32 to vector<8x128xf32>
    %163 = arith.addf %162, %161 : vector<8x128xf32>
    %164 = arith.divf %162, %163 : vector<8x128xf32>
    %165 = vector.extract_strided_slice %164 {offsets = [0, 0], sizes = [8, 32], strides = [1, 1]} : vector<8x128xf32> to vector<8x32xf32>
    %166 = vector.extract_strided_slice %164 {offsets = [0, 32], sizes = [8, 32], strides = [1, 1]} : vector<8x128xf32> to vector<8x32xf32>
    %167 = vector.extract_strided_slice %164 {offsets = [0, 96], sizes = [8, 32], strides = [1, 1]} : vector<8x128xf32> to vector<8x32xf32>
    %168 = vector.extract_strided_slice %159 {offsets = [0, 64], sizes = [8, 32], strides = [1, 1]} : vector<8x128xf32> to vector<8x32xf32>
    %169 = math.tanh %168 : vector<8x32xf32>
    %170 = arith.mulf %166, %152 : vector<8x32xf32>
    %171 = arith.mulf %165, %169 : vector<8x32xf32>
    %172 = arith.addf %170, %171 : vector<8x32xf32>
    %173 = math.tanh %172 : vector<8x32xf32>
    %174 = arith.mulf %167, %173 : vector<8x32xf32>
    %c8_i32 = arith.constant 8 : i32
    %c0_49 = arith.constant 0 : index
    %c0_50 = arith.constant 0 : index
    %175 = vector.load %arg8[%c0_49, %c0_50] : memref<8x32xf32, #tpu.memory_space<vmem>>, vector<8x32xf32>
    tpu.vector_store %arg8[%c0_49, %c0_50], %174 {strides = array<i32>} : memref<8x32xf32, #tpu.memory_space<vmem>>, vector<8x32xf32>,
    %c0_51 = arith.constant 0 : index
    %c0_52 = arith.constant 0 : index
    %176 = vector.load %arg9[%c0_51, %c0_52] : memref<8x32xf32, #tpu.memory_space<vmem>>, vector<8x32xf32>
    tpu.vector_store %arg9[%c0_51, %c0_52], %172 {strides = array<i32>} : memref<8x32xf32, #tpu.memory_space<vmem>>, vector<8x32xf32>,
    %c0_i32_53 = arith.constant 0 : i32
    %177 = arith.cmpi eq, %arg1, %c0_i32_53 : i32
    %178 = arith.extui %177 : i1 to i32
    %c0_i32_54 = arith.constant 0 : i32
    %179 = arith.cmpi ne, %178, %c0_i32_54 : i32
    scf.if %179 {
      %c0_55 = arith.constant 0 : index
      %c0_56 = arith.constant 0 : index
      %180 = vector.load %arg6[%c0_55, %c0_56] : memref<8x32xf32, #tpu.memory_space<vmem>>, vector<8x32xf32>
      tpu.vector_store %arg6[%c0_55, %c0_56], %174 {strides = array<i32>} : memref<8x32xf32, #tpu.memory_space<vmem>>, vector<8x32xf32>,
    } else {
    }
    return
  }
  func.func @transform_0(%arg0: i32, %arg1: i32) -> (i32, i32, i32) {
    %c0_i32 = arith.constant 0 : i32
    %c0_i32_0 = arith.constant 0 : i32
    return %arg1, %arg0, %c0_i32 : i32, i32, i32
  }
  func.func @transform_1(%arg0: i32, %arg1: i32) -> (i32, i32) {
    %c0_i32 = arith.constant 0 : i32
    %c0_i32_0 = arith.constant 0 : i32
    %c0_i32_1 = arith.constant 0 : i32
    return %c0_i32, %c0_i32_0 : i32, i32
  }
  func.func @transform_2(%arg0: i32, %arg1: i32) -> (i32, i32) {
    %c0_i32 = arith.constant 0 : i32
    %c0_i32_0 = arith.constant 0 : i32
    %c0_i32_1 = arith.constant 0 : i32
    return %c0_i32, %c0_i32_0 : i32, i32
  }
  func.func @transform_3(%arg0: i32, %arg1: i32) -> (i32, i32) {
    %c0_i32 = arith.constant 0 : i32
    %c0_i32_0 = arith.constant 0 : i32
    %c0_i32_1 = arith.constant 0 : i32
    return %c0_i32, %c0_i32_0 : i32, i32
  }
  func.func @transform_4(%arg0: i32, %arg1: i32) -> (i32, i32) {
    %c0_i32 = arith.constant 0 : i32
    %c0_i32_0 = arith.constant 0 : i32
    return %arg0, %c0_i32 : i32, i32
  }
}

</mosaic_0001>

<llo_original>
// kernel: tpu_custom_call.1
$region0: #{tpu_custom_call.1}
  #allocation0 [shape = 'u32[]', space=smem, size = 0x4, offset = 0x4, fixed_abs, tag = 'smem constant byte address 0x4 - core index']
  #allocation1 [shape = 'u32[144,128]{1,0:T(1,128)}', space=vmem, size = 0x12000, scoped, tag = 'internal scratch']
  #allocation2 [shape = 'f32[8,8,128]{2,1,0:T(8,128)}', space=vmem, size = 0x8000, scoped, tag = 'scratch operand']
  #allocation3 [shape = 'f32[8,32]{1,0:T(8,128)}', space=vmem, size = 0x1000, scoped, tag = 'scratch operand']
  #allocation4 [shape = 'f32[8,32]{1,0:T(8,128)}', space=vmem, size = 0x1000, scoped, tag = 'scratch operand']
  %s0 = inlined_call_operand.hbm [shape: f32[8,8,16], index: 0, kind: input, shape index: {}]
  %s1 = inlined_call_operand.hbm [shape: f32[16,128], index: 1, kind: input, shape index: {}]
  %s2 = inlined_call_operand.hbm [shape: f32[32,128], index: 2, kind: input, shape index: {}]
  %s3 = inlined_call_operand.vmem [shape: f32[1,128], index: 3, kind: input, shape index: {}]
  %s4 = inlined_call_operand.hbm [shape: f32[8,32], index: 4, kind: output, shape index: {}]
  %s5 = sld [smem:[#allocation0]]
  $region46: #{tpu_custom_call.1} parent=0
    _
  %s7 = ssub.s32 1, %s5
  %s8 = scalar_select 0, %s7, %s5
  $region1: #{tpu_custom_call.1} parent=0
    #allocation5 [shape = 'u8[32768]{0}', space=vmem, size = 0x8000, scoped, tag = 'input window, operand 0, single buffered']
    #allocation6 [shape = 's32[1]{0}', space=sflag, size = 0x4, scoped, tag = 'scoped memory for tpu_custom_call.1']
    #allocation7 [shape = 's32[1]{0}', space=sflag, size = 0x4, scoped, tag = 'scoped memory for tpu_custom_call.1']
    #allocation8 [shape = 'u8[8192]{0}', space=vmem, size = 0x2000, scoped, tag = 'input window, operand 1, single buffered']
    #allocation9 [shape = 's32[1]{0}', space=sflag, size = 0x4, scoped, tag = 'scoped memory for tpu_custom_call.1']
    #allocation10 [shape = 'u8[16384]{0}', space=vmem, size = 0x4000, scoped, tag = 'input window, operand 2, single buffered']
    #allocation11 [shape = 'u8[4096]{0}', space=vmem, size = 0x1000, scoped, tag = 'output window, operand 0, single buffered']
    %9 = vsyncpa [#allocation6], 0
    %10 = vsyncpa [#allocation9], 0
    %11 = vsyncpa [#allocation7], 0
    // Predicated region
    $region2: #{tpu_custom_call.1} parent=1 // pred_check
      _
    $region3: #{tpu_custom_call.1} parent=1 // pred_check_branch
      %13 = sbr.rel (0) target = $region5
    $region4: #{tpu_custom_call.1} parent=1 // pred_region
      %s15 = ssub.s32 1024, 1024
      %16 = vsyncadd [#allocation6], %s15
      %s17 = sshll.u32 [#allocation5], 4
      %s18 = int_to_ptr.vmem [resolvable:$true] %s17
      %23 = dma.hbm_to_vmem [thread:$0]  %s0, 1024, %s18, [#allocation6], 128, 128, 8
    $region5: #{tpu_custom_call.1} parent=1 // pred_fallthru
      _
    // Predicated region
    $region6: #{tpu_custom_call.1} parent=1 // pred_check
      _
    $region7: #{tpu_custom_call.1} parent=1 // pred_check_branch
      %25 = sbr.rel (0) target = $region9
    $region8: #{tpu_custom_call.1} parent=1 // pred_region
      %s27 = ssub.s32 256, 256
      %28 = vsyncadd [#allocation9], %s27
      %s29 = sshll.u32 [#allocation8], 4
      %s30 = int_to_ptr.vmem [resolvable:$true] %s29
      %35 = dma.hbm_to_vmem [thread:$0]  %s1, 256, %s30, [#allocation9], 128, 128, 8
    $region9: #{tpu_custom_call.1} parent=1 // pred_fallthru
      _
    // Predicated region
    $region10: #{tpu_custom_call.1} parent=1 // pred_check
      _
    $region11: #{tpu_custom_call.1} parent=1 // pred_check_branch
      %37 = sbr.rel (0) target = $region13
    $region12: #{tpu_custom_call.1} parent=1 // pred_region
      %s39 = ssub.s32 512, 512
      %40 = vsyncadd [#allocation9], %s39
      %s41 = sshll.u32 [#allocation10], 4
      %s42 = int_to_ptr.vmem [resolvable:$true] %s41
      %47 = dma.hbm_to_vmem [thread:$0]  %s2, 512, %s42, [#allocation9], 128, 128, 8
    $region13: #{tpu_custom_call.1} parent=1 // pred_fallthru
      _
    // Predicated region
    $region14: #{tpu_custom_call.1} parent=1 // pred_check
      _
    $region15: #{tpu_custom_call.1} parent=1 // pred_check_branch
      %49 = sbr.rel (0) target = $region17
    $region16: #{tpu_custom_call.1} parent=1 // pred_region
      _
    $region17: #{tpu_custom_call.1} parent=1 // pred_fallthru
      _
    // Predicated region
    $region18: #{tpu_custom_call.1} parent=1 // pred_check
      _
    $region19: #{tpu_custom_call.1} parent=1 // pred_check_branch
      %51 = sbr.rel (0) target = $region21
    $region20: #{tpu_custom_call.1} parent=1 // pred_region
      %52 = dma.done [#allocation6], 1024
    $region21: #{tpu_custom_call.1} parent=1 // pred_fallthru
      _
    // Predicated region
    $region22: #{tpu_custom_call.1} parent=1 // pred_check
      _
    $region23: #{tpu_custom_call.1} parent=1 // pred_check_branch
      %54 = sbr.rel (0) target = $region25
    $region24: #{tpu_custom_call.1} parent=1 // pred_region
      %55 = dma.done [#allocation9], 256
    $region25: #{tpu_custom_call.1} parent=1 // pred_fallthru
      _
    // Predicated region
    $region26: #{tpu_custom_call.1} parent=1 // pred_check
      _
    $region27: #{tpu_custom_call.1} parent=1 // pred_check_branch
      %57 = sbr.rel (0) target = $region29
    $region28: #{tpu_custom_call.1} parent=1 // pred_region
      %58 = dma.done [#allocation9], 512
    $region29: #{tpu_custom_call.1} parent=1 // pred_fallthru
      _
    %p59 = scmp.eq.s32.totalorder 0, 0
    // Predicated region
    $region30: #{tpu_custom_call.1} parent=1 // pred_check
      %p60 = pneg %p59
    $region31: #{tpu_custom_call.1} parent=1 // pred_check_branch
      %62 = sbr.rel (%p60) target = $region33
    $region32: #{tpu_custom_call.1} parent=1 // pred_region
      %vm63 = vcmask 261120
      %64 = vst.msk [vmem:[#allocation3] sm:$0xff] %vm63, 0.0
      %65 = vst.msk [vmem:[#allocation4] sm:$0xff] %vm63, 0.0
    $region33: #{tpu_custom_call.1} parent=1 // pred_fallthru
      _
    %v66 = vld [vmem:[#allocation5] sm:$0xff]
    %v67 = vld [vmem:[#allocation5 + $0x8] sm:$0xff]
    %v68 = vld [vmem:[#allocation5 + $0x10] sm:$0xff]
    %v69 = vld [vmem:[#allocation5 + $0x18] sm:$0xff]
    %v70 = vld [vmem:[#allocation5 + $0x20] sm:$0xff]
    %v71 = vld [vmem:[#allocation5 + $0x28] sm:$0xff]
    %v72 = vld [vmem:[#allocation5 + $0x30] sm:$0xff]
    %v73 = vld [vmem:[#allocation5 + $0x38] sm:$0xff]
    %v74 = vld [vmem:[#allocation8] sm:$0xff]
    %v75 = vld [vmem:[#allocation8 + $0x8] sm:$0xff]
    %v76 = vld [vmem:[%s3] sm:$0x1]
    %v78 = vlaneseq
    %v79 = vshrl.u32 %v78, 7
    %v80 = vsub.s32 0, %v79
    %v81 = vrot.slane %v76, %v80
    %vm83 = vcmask 130048
    %v85 = vsel %vm83, %v66, 0
    %v88 = vsel %vm83, %v67, 0
    %v91 = vsel %vm83, %v68, 0
    %v94 = vsel %vm83, %v69, 0
    %v97 = vsel %vm83, %v70, 0
    %v100 = vsel %vm83, %v71, 0
    %v103 = vsel %vm83, %v72, 0
    %v106 = vsel %vm83, %v73, 0
    %108 = vmatprep.subr.mxu0 0.0
    %109 = vmatpush1.msra.mxu0 0.0
    %110 = vmatprep.subr.mxu0 0.0
    %111 = vmatpush1.msra.mxu0 0.0
    %112 = vmatprep.subr.mxu0 0.0
    %113 = vmatpush1.msra.mxu0 0.0
    %114 = vmatprep.subr.mxu0 0.0
    %115 = vmatpush1.msra.mxu0 0.0
    %116 = vmatprep.subr.mxu0 0.0
    %117 = vmatpush1.msra.mxu0 0.0
    %118 = vmatprep.subr.mxu0 0.0
    %119 = vmatpush1.msra.mxu0 0.0
    %120 = vmatprep.subr.mxu0 0.0
    %121 = vmatpush1.msra.mxu0 0.0
    %122 = vmatprep.subr.mxu0 0.0
    %123 = vmatpush1.msra.mxu0 0.0
    %124 = vmatprep.subr.mxu0 0.0
    %125 = vmatpush1.msra.mxu0 0.0
    %126 = vmatprep.subr.mxu0 0.0
    %127 = vmatpush1.msra.mxu0 0.0
    %128 = vmatprep.subr.mxu0 0.0
    %129 = vmatpush1.msra.mxu0 0.0
    %130 = vmatprep.subr.mxu0 0.0
    %131 = vmatpush1.msra.mxu0 0.0
    %132 = vmatprep.subr.mxu0 0.0
    %133 = vmatpush1.msra.mxu0 0.0
    %134 = vmatprep.subr.mxu0 0.0
    %135 = vmatpush1.msra.mxu0 0.0
    %136 = vmatprep.subr.mxu0 0.0
    %137 = vmatpush1.msra.mxu0 %v75
    %138 = vmatprep.subr.mxu0 0.0
    %139 = vmatpush1.msra.mxu0 %v74
    %140 = vmatprep.subr.mxu0 0.0
    %141 = vmatpush2.msra.mxu0 0.0
    %142 = vmatprep.subr.mxu0 0.0
    %143 = vmatpush2.msra.mxu0 0.0
    %144 = vmatprep.subr.mxu0 0.0
    %145 = vmatpush2.msra.mxu0 0.0
    %146 = vmatprep.subr.mxu0 0.0
    %147 = vmatpush2.msra.mxu0 0.0
    %148 = vmatprep.subr.mxu0 0.0
    %149 = vmatpush2.msra.mxu0 0.0
    %150 = vmatprep.subr.mxu0 0.0
    %151 = vmatpush2.msra.mxu0 0.0
    %152 = vmatprep.subr.mxu0 0.0
    %153 = vmatpush2.msra.mxu0 0.0
    %154 = vmatprep.subr.mxu0 0.0
    %155 = vmatpush2.msra.mxu0 0.0
    %156 = vmatprep.subr.mxu0 0.0
    %157 = vmatpush2.msra.mxu0 0.0
    %158 = vmatprep.subr.mxu0 0.0
    %159 = vmatpush2.msra.mxu0 0.0
    %160 = vmatprep.subr.mxu0 0.0
    %161 = vmatpush2.msra.mxu0 0.0
    %162 = vmatprep.subr.mxu0 0.0
    %163 = vmatpush2.msra.mxu0 0.0
    %164 = vmatprep.subr.mxu0 0.0
    %165 = vmatpush2.msra.mxu0 0.0
    %166 = vmatprep.subr.mxu0 0.0
    %167 = vmatpush2.msra.mxu0 0.0
    %168 = vmatprep.subr.mxu0 0.0
    %169 = vmatpush2.msra.mxu0 0.0
    %170 = vmatprep.subr.mxu0 0.0
    %171 = vmatpush2.msra.mxu0 0.0
    %172 = vmatprep.mubr.f32.mxu0 0.0
    %173 = vmatmul.mubr.f32.gmra.mxu0 %v85
    %v174 = vpop.f32.mrf.mxu0
    %v175 = vadd.f32 %v81, %v174
    %v176 = vpop.f32.mrf.mxu0
    %177 = vmatprep.mubr.f32.mxu0 0.0
    %178 = vmatmul.mubr.f32.gmra.mxu0 %v88
    %v179 = vpop.f32.mrf.mxu0
    %v180 = vadd.f32 %v81, %v179
    %v181 = vpop.f32.mrf.mxu0
    %182 = vmatprep.mubr.f32.mxu0 0.0
    %183 = vmatmul.mubr.f32.gmra.mxu0 %v91
    %v184 = vpop.f32.mrf.mxu0
    %v185 = vadd.f32 %v81, %v184
    %v186 = vpop.f32.mrf.mxu0
    %187 = vmatprep.mubr.f32.mxu0 0.0
    %188 = vmatmul.mubr.f32.gmra.mxu0 %v94
    %v189 = vpop.f32.mrf.mxu0
    %v190 = vadd.f32 %v81, %v189
    %v191 = vpop.f32.mrf.mxu0
    %192 = vmatprep.mubr.f32.mxu0 0.0
    %193 = vmatmul.mubr.f32.gmra.mxu0 %v97
    %v194 = vpop.f32.mrf.mxu0
    %v195 = vadd.f32 %v81, %v194
    %v196 = vpop.f32.mrf.mxu0
    %197 = vmatprep.mubr.f32.mxu0 0.0
    %198 = vmatmul.mubr.f32.gmra.mxu0 %v100
    %v199 = vpop.f32.mrf.mxu0
    %v200 = vadd.f32 %v81, %v199
    %v201 = vpop.f32.mrf.mxu0
    %202 = vmatprep.mubr.f32.mxu0 0.0
    %203 = vmatmul.mubr.f32.gmra.mxu0 %v103
    %v204 = vpop.f32.mrf.mxu0
    %v205 = vadd.f32 %v81, %v204
    %v206 = vpop.f32.mrf.mxu0
    %207 = vmatprep.mubr.f32.mxu0 0.0
    %208 = vmatmul.mubr.f32.gmra.mxu0 %v106
    %v209 = vpop.f32.mrf.mxu0
    %v210 = vadd.f32 %v81, %v209
    %v211 = vpop.f32.mrf.mxu0
    %212 = vdwg.mxu0
    %213 = vst [vmem:[#allocation2] sm:$0xff] %v175
    %214 = vst [vmem:[#allocation2 + $0x8] sm:$0xff] %v180
    %215 = vst [vmem:[#allocation2 + $0x10] sm:$0xff] %v185
    %216 = vst [vmem:[#allocation2 + $0x18] sm:$0xff] %v190
    %217 = vst [vmem:[#allocation2 + $0x20] sm:$0xff] %v195
    %218 = vst [vmem:[#allocation2 + $0x28] sm:$0xff] %v200
    %219 = vst [vmem:[#allocation2 + $0x30] sm:$0xff] %v205
    %220 = vst [vmem:[#allocation2 + $0x38] sm:$0xff] %v210
    %v221 = vld [vmem:[#allocation10] sm:$0xff]
    %v222 = vld [vmem:[#allocation10 + $0x8] sm:$0xff]
    %v223 = vld [vmem:[#allocation10 + $0x10] sm:$0xff]
    %v224 = vld [vmem:[#allocation10 + $0x18] sm:$0xff]
    %v225 = vld [vmem:[#allocation3] sm:$0xff]
    %v226 = vld [vmem:[#allocation4] sm:$0xff]
    %v227 = vld [vmem:[#allocation2] sm:$0xff]
    %vm228 = vcmask 261120
    %v230 = vsel %vm228, %v225, 0
    %232 = vmatprep.subr.mxu0 0.0
    %233 = vmatpush1.msra.mxu0 0.0
    %234 = vmatprep.subr.mxu0 0.0
    %235 = vmatpush1.msra.mxu0 0.0
    %236 = vmatprep.subr.mxu0 0.0
    %237 = vmatpush1.msra.mxu0 0.0
    %238 = vmatprep.subr.mxu0 0.0
    %239 = vmatpush1.msra.mxu0 0.0
    %240 = vmatprep.subr.mxu0 0.0
    %241 = vmatpush1.msra.mxu0 0.0
    %242 = vmatprep.subr.mxu0 0.0
    %243 = vmatpush1.msra.mxu0 0.0
    %244 = vmatprep.subr.mxu0 0.0
    %245 = vmatpush1.msra.mxu0 0.0
    %246 = vmatprep.subr.mxu0 0.0
    %247 = vmatpush1.msra.mxu0 0.0
    %248 = vmatprep.subr.mxu0 0.0
    %249 = vmatpush1.msra.mxu0 0.0
    %250 = vmatprep.subr.mxu0 0.0
    %251 = vmatpush1.msra.mxu0 0.0
    %252 = vmatprep.subr.mxu0 0.0
    %253 = vmatpush1.msra.mxu0 0.0
    %254 = vmatprep.subr.mxu0 0.0
    %255 = vmatpush1.msra.mxu0 0.0
    %256 = vmatprep.subr.mxu0 0.0
    %257 = vmatpush1.msra.mxu0 %v224
    %258 = vmatprep.subr.mxu0 0.0
    %259 = vmatpush1.msra.mxu0 %v223
    %260 = vmatprep.subr.mxu0 0.0
    %261 = vmatpush1.msra.mxu0 %v222
    %262 = vmatprep.subr.mxu0 0.0
    %263 = vmatpush1.msra.mxu0 %v221
    %264 = vmatprep.subr.mxu0 0.0
    %265 = vmatpush2.msra.mxu0 0.0
    %266 = vmatprep.subr.mxu0 0.0
    %267 = vmatpush2.msra.mxu0 0.0
    %268 = vmatprep.subr.mxu0 0.0
    %269 = vmatpush2.msra.mxu0 0.0
    %270 = vmatprep.subr.mxu0 0.0
    %271 = vmatpush2.msra.mxu0 0.0
    %272 = vmatprep.subr.mxu0 0.0
    %273 = vmatpush2.msra.mxu0 0.0
    %274 = vmatprep.subr.mxu0 0.0
    %275 = vmatpush2.msra.mxu0 0.0
    %276 = vmatprep.subr.mxu0 0.0
    %277 = vmatpush2.msra.mxu0 0.0
    %278 = vmatprep.subr.mxu0 0.0
    %279 = vmatpush2.msra.mxu0 0.0
    %280 = vmatprep.subr.mxu0 0.0
    %281 = vmatpush2.msra.mxu0 0.0
    %282 = vmatprep.subr.mxu0 0.0
    %283 = vmatpush2.msra.mxu0 0.0
    %284 = vmatprep.subr.mxu0 0.0
    %285 = vmatpush2.msra.mxu0 0.0
    %286 = vmatprep.subr.mxu0 0.0
    %287 = vmatpush2.msra.mxu0 0.0
    %288 = vmatprep.subr.mxu0 0.0
    %289 = vmatpush2.msra.mxu0 0.0
    %290 = vmatprep.subr.mxu0 0.0
    %291 = vmatpush2.msra.mxu0 0.0
    %292 = vmatprep.subr.mxu0 0.0
    %293 = vmatpush2.msra.mxu0 0.0
    %294 = vmatprep.subr.mxu0 0.0
    %295 = vmatpush2.msra.mxu0 0.0
    %296 = vmatprep.mubr.f32.mxu0 0.0
    %297 = vmatmul.mubr.f32.gmra.mxu0 %v230
    %v298 = vpop.f32.mrf.mxu0
    %v299 = vadd.f32 0.0, %v298
    %v300 = vpop.f32.mrf.mxu0
    %301 = vdwg.mxu0
    %v302 = vadd.f32 %v227, %v299
    %v303 = vxor.u32 %v302, 2147483648
    %v304 = vmul.f32 %v303, 1.442695
    %v305 = vpow.pop %v304
    %v306 = vadd.f32 %v305, 1.0
    %v307 = vrcp.pop %v306
    %v308 = vmul.f32 1.0, %v307
    %v309 = vtanh.pop %v302
    %311 = vrot.lane.b32.xlu0 %v226, 32
    %v312 = vpop.permute.xlu0 %311
    %v314 = vmul.f32 %v308, %v312
    %316 = vrot.lane.b32.xlu0 %v309, 64
    %v317 = vpop.permute.xlu0 %316
    %v319 = vmul.f32 %v308, %v317
    %321 = vrot.lane.b32.xlu0 %v319, 32
    %v322 = vpop.permute.xlu0 %321
    %v324 = vadd.f32 %v314, %v322
    %v325 = vtanh.pop %v324
    %327 = vrot.lane.b32.xlu0 %v325, 64
    %v328 = vpop.permute.xlu0 %327
    %v330 = vmul.f32 %v308, %v328
    %s331 = scalar_lea.vmem [#allocation2], 8
    %v332 = vld [vmem:[%s331] sm:$0xff]
    %334 = vrot.lane.b32.xlu0 %v330, 32
    %v335 = vpop.permute.xlu0 %334
    %v336 = vsel %vm228, %v335, 0
    %338 = vmatprep.subr.mxu0 0.0
    %339 = vmatpush1.msra.mxu0 0.0
    %340 = vmatprep.subr.mxu0 0.0
    %341 = vmatpush1.msra.mxu0 0.0
    %342 = vmatprep.subr.mxu0 0.0
    %343 = vmatpush1.msra.mxu0 0.0
    %344 = vmatprep.subr.mxu0 0.0
    %345 = vmatpush1.msra.mxu0 0.0
    %346 = vmatprep.subr.mxu0 0.0
    %347 = vmatpush1.msra.mxu0 0.0
    %348 = vmatprep.subr.mxu0 0.0
    %349 = vmatpush1.msra.mxu0 0.0
    %350 = vmatprep.subr.mxu0 0.0
    %351 = vmatpush1.msra.mxu0 0.0
    %352 = vmatprep.subr.mxu0 0.0
    %353 = vmatpush1.msra.mxu0 0.0
    %354 = vmatprep.subr.mxu0 0.0
    %355 = vmatpush1.msra.mxu0 0.0
    %356 = vmatprep.subr.mxu0 0.0
    %357 = vmatpush1.msra.mxu0 0.0
    %358 = vmatprep.subr.mxu0 0.0
    %359 = vmatpush1.msra.mxu0 0.0
    %360 = vmatprep.subr.mxu0 0.0
    %361 = vmatpush1.msra.mxu0 0.0
    %362 = vmatprep.subr.mxu0 0.0
    %363 = vmatpush1.msra.mxu0 %v224
    %364 = vmatprep.subr.mxu0 0.0
    %365 = vmatpush1.msra.mxu0 %v223
    %366 = vmatprep.subr.mxu0 0.0
    %367 = vmatpush1.msra.mxu0 %v222
    %368 = vmatprep.subr.mxu0 0.0
    %369 = vmatpush1.msra.mxu0 %v221
    %370 = vmatprep.subr.mxu0 0.0
    %371 = vmatpush2.msra.mxu0 0.0
    %372 = vmatprep.subr.mxu0 0.0
    %373 = vmatpush2.msra.mxu0 0.0
    %374 = vmatprep.subr.mxu0 0.0
    %375 = vmatpush2.msra.mxu0 0.0
    %376 = vmatprep.subr.mxu0 0.0
    %377 = vmatpush2.msra.mxu0 0.0
    %378 = vmatprep.subr.mxu0 0.0
    %379 = vmatpush2.msra.mxu0 0.0
    %380 = vmatprep.subr.mxu0 0.0
    %381 = vmatpush2.msra.mxu0 0.0
    %382 = vmatprep.subr.mxu0 0.0
    %383 = vmatpush2.msra.mxu0 0.0
    %384 = vmatprep.subr.mxu0 0.0
    %385 = vmatpush2.msra.mxu0 0.0
    %386 = vmatprep.subr.mxu0 0.0
    %387 = vmatpush2.msra.mxu0 0.0
    %388 = vmatprep.subr.mxu0 0.0
    %389 = vmatpush2.msra.mxu0 0.0
    %390 = vmatprep.subr.mxu0 0.0
    %391 = vmatpush2.msra.mxu0 0.0
    %392 = vmatprep.subr.mxu0 0.0
    %393 = vmatpush2.msra.mxu0 0.0
    %394 = vmatprep.subr.mxu0 0.0
    %395 = vmatpush2.msra.mxu0 0.0
    %396 = vmatprep.subr.mxu0 0.0
    %397 = vmatpush2.msra.mxu0 0.0
    %398 = vmatprep.subr.mxu0 0.0
    %399 = vmatpush2.msra.mxu0 0.0
    %400 = vmatprep.subr.mxu0 0.0
    %401 = vmatpush2.msra.mxu0 0.0
    %402 = vmatprep.mubr.f32.mxu0 0.0
    %403 = vmatmul.mubr.f32.gmra.mxu0 %v336
    %v404 = vpop.f32.mrf.mxu0
    %v405 = vadd.f32 0.0, %v404
    %v406 = vpop.f32.mrf.mxu0
    %407 = vdwg.mxu0
    %v408 = vadd.f32 %v332, %v405
    %v409 = vxor.u32 %v408, 2147483648
    %v410 = vmul.f32 %v409, 1.442695
    %v411 = vpow.pop %v410
    %v412 = vadd.f32 %v411, 1.0
    %v413 = vrcp.pop %v412
    %v414 = vmul.f32 1.0, %v413
    %v415 = vtanh.pop %v408
    %v416 = vmul.f32 %v414, %v324
    %418 = vrot.lane.b32.xlu0 %v415, 64
    %v419 = vpop.permute.xlu0 %418
    %v421 = vmul.f32 %v414, %v419
    %423 = vrot.lane.b32.xlu0 %v421, 32
    %v424 = vpop.permute.xlu0 %423
    %v426 = vadd.f32 %v416, %v424
    %v427 = vtanh.pop %v426
    %429 = vrot.lane.b32.xlu0 %v427, 64
    %v430 = vpop.permute.xlu0 %429
    %v432 = vmul.f32 %v414, %v430
    %s433 = scalar_lea.vmem [#allocation2], 16
    %v434 = vld [vmem:[%s433] sm:$0xff]
    %436 = vrot.lane.b32.xlu0 %v432, 32
    %v437 = vpop.permute.xlu0 %436
    %v438 = vsel %vm228, %v437, 0
    %440 = vmatprep.subr.mxu0 0.0
    %441 = vmatpush1.msra.mxu0 0.0
    %442 = vmatprep.subr.mxu0 0.0
    %443 = vmatpush1.msra.mxu0 0.0
    %444 = vmatprep.subr.mxu0 0.0
    %445 = vmatpush1.msra.mxu0 0.0
    %446 = vmatprep.subr.mxu0 0.0
    %447 = vmatpush1.msra.mxu0 0.0
    %448 = vmatprep.subr.mxu0 0.0
    %449 = vmatpush1.msra.mxu0 0.0
    %450 = vmatprep.subr.mxu0 0.0
    %451 = vmatpush1.msra.mxu0 0.0
    %452 = vmatprep.subr.mxu0 0.0
    %453 = vmatpush1.msra.mxu0 0.0
    %454 = vmatprep.subr.mxu0 0.0
    %455 = vmatpush1.msra.mxu0 0.0
    %456 = vmatprep.subr.mxu0 0.0
    %457 = vmatpush1.msra.mxu0 0.0
    %458 = vmatprep.subr.mxu0 0.0
    %459 = vmatpush1.msra.mxu0 0.0
    %460 = vmatprep.subr.mxu0 0.0
    %461 = vmatpush1.msra.mxu0 0.0
    %462 = vmatprep.subr.mxu0 0.0
    %463 = vmatpush1.msra.mxu0 0.0
    %464 = vmatprep.subr.mxu0 0.0
    %465 = vmatpush1.msra.mxu0 %v224
    %466 = vmatprep.subr.mxu0 0.0
    %467 = vmatpush1.msra.mxu0 %v223
    %468 = vmatprep.subr.mxu0 0.0
    %469 = vmatpush1.msra.mxu0 %v222
    %470 = vmatprep.subr.mxu0 0.0
    %471 = vmatpush1.msra.mxu0 %v221
    %472 = vmatprep.subr.mxu0 0.0
    %473 = vmatpush2.msra.mxu0 0.0
    %474 = vmatprep.subr.mxu0 0.0
    %475 = vmatpush2.msra.mxu0 0.0
    %476 = vmatprep.subr.mxu0 0.0
    %477 = vmatpush2.msra.mxu0 0.0
    %478 = vmatprep.subr.mxu0 0.0
    %479 = vmatpush2.msra.mxu0 0.0
    %480 = vmatprep.subr.mxu0 0.0
    %481 = vmatpush2.msra.mxu0 0.0
    %482 = vmatprep.subr.mxu0 0.0
    %483 = vmatpush2.msra.mxu0 0.0
    %484 = vmatprep.subr.mxu0 0.0
    %485 = vmatpush2.msra.mxu0 0.0
    %486 = vmatprep.subr.mxu0 0.0
    %487 = vmatpush2.msra.mxu0 0.0
    %488 = vmatprep.subr.mxu0 0.0
    %489 = vmatpush2.msra.mxu0 0.0
    %490 = vmatprep.subr.mxu0 0.0
    %491 = vmatpush2.msra.mxu0 0.0
    %492 = vmatprep.subr.mxu0 0.0
    %493 = vmatpush2.msra.mxu0 0.0
    %494 = vmatprep.subr.mxu0 0.0
    %495 = vmatpush2.msra.mxu0 0.0
    %496 = vmatprep.subr.mxu0 0.0
    %497 = vmatpush2.msra.mxu0 0.0
    %498 = vmatprep.subr.mxu0 0.0
    %499 = vmatpush2.msra.mxu0 0.0
    %500 = vmatprep.subr.mxu0 0.0
    %501 = vmatpush2.msra.mxu0 0.0
    %502 = vmatprep.subr.mxu0 0.0
    %503 = vmatpush2.msra.mxu0 0.0
    %504 = vmatprep.mubr.f32.mxu0 0.0
    %505 = vmatmul.mubr.f32.gmra.mxu0 %v438
    %v506 = vpop.f32.mrf.mxu0
    %v507 = vadd.f32 0.0, %v506
    %v508 = vpop.f32.mrf.mxu0
    %509 = vdwg.mxu0
    %v510 = vadd.f32 %v434, %v507
    %v511 = vxor.u32 %v510, 2147483648
    %v512 = vmul.f32 %v511, 1.442695
    %v513 = vpow.pop %v512
    %v514 = vadd.f32 %v513, 1.0
    %v515 = vrcp.pop %v514
    %v516 = vmul.f32 1.0, %v515
    %v517 = vtanh.pop %v510
    %v518 = vmul.f32 %v516, %v426
    %520 = vrot.lane.b32.xlu0 %v517, 64
    %v521 = vpop.permute.xlu0 %520
    %v523 = vmul.f32 %v516, %v521
    %525 = vrot.lane.b32.xlu0 %v523, 32
    %v526 = vpop.permute.xlu0 %525
    %v528 = vadd.f32 %v518, %v526
    %v529 = vtanh.pop %v528
    %531 = vrot.lane.b32.xlu0 %v529, 64
    %v532 = vpop.permute.xlu0 %531
    %v534 = vmul.f32 %v516, %v532
    %s535 = scalar_lea.vmem [#allocation2], 24
    %v536 = vld [vmem:[%s535] sm:$0xff]
    %538 = vrot.lane.b32.xlu0 %v534, 32
    %v539 = vpop.permute.xlu0 %538
    %v540 = vsel %vm228, %v539, 0
    %542 = vmatprep.subr.mxu0 0.0
    %543 = vmatpush1.msra.mxu0 0.0
    %544 = vmatprep.subr.mxu0 0.0
    %545 = vmatpush1.msra.mxu0 0.0
    %546 = vmatprep.subr.mxu0 0.0
    %547 = vmatpush1.msra.mxu0 0.0
    %548 = vmatprep.subr.mxu0 0.0
    %549 = vmatpush1.msra.mxu0 0.0
    %550 = vmatprep.subr.mxu0 0.0
    %551 = vmatpush1.msra.mxu0 0.0
    %552 = vmatprep.subr.mxu0 0.0
    %553 = vmatpush1.msra.mxu0 0.0
    %554 = vmatprep.subr.mxu0 0.0
    %555 = vmatpush1.msra.mxu0 0.0
    %556 = vmatprep.subr.mxu0 0.0
    %557 = vmatpush1.msra.mxu0 0.0
    %558 = vmatprep.subr.mxu0 0.0
    %559 = vmatpush1.msra.mxu0 0.0
    %560 = vmatprep.subr.mxu0 0.0
    %561 = vmatpush1.msra.mxu0 0.0
    %562 = vmatprep.subr.mxu0 0.0
    %563 = vmatpush1.msra.mxu0 0.0
    %564 = vmatprep.subr.mxu0 0.0
    %565 = vmatpush1.msra.mxu0 0.0
    %566 = vmatprep.subr.mxu0 0.0
    %567 = vmatpush1.msra.mxu0 %v224
    %568 = vmatprep.subr.mxu0 0.0
    %569 = vmatpush1.msra.mxu0 %v223
    %570 = vmatprep.subr.mxu0 0.0
    %571 = vmatpush1.msra.mxu0 %v222
    %572 = vmatprep.subr.mxu0 0.0
    %573 = vmatpush1.msra.mxu0 %v221
    %574 = vmatprep.subr.mxu0 0.0
    %575 = vmatpush2.msra.mxu0 0.0
    %576 = vmatprep.subr.mxu0 0.0
    %577 = vmatpush2.msra.mxu0 0.0
    %578 = vmatprep.subr.mxu0 0.0
    %579 = vmatpush2.msra.mxu0 0.0
    %580 = vmatprep.subr.mxu0 0.0
    %581 = vmatpush2.msra.mxu0 0.0
    %582 = vmatprep.subr.mxu0 0.0
    %583 = vmatpush2.msra.mxu0 0.0
    %584 = vmatprep.subr.mxu0 0.0
    %585 = vmatpush2.msra.mxu0 0.0
    %586 = vmatprep.subr.mxu0 0.0
    %587 = vmatpush2.msra.mxu0 0.0
    %588 = vmatprep.subr.mxu0 0.0
    %589 = vmatpush2.msra.mxu0 0.0
    %590 = vmatprep.subr.mxu0 0.0
    %591 = vmatpush2.msra.mxu0 0.0
    %592 = vmatprep.subr.mxu0 0.0
    %593 = vmatpush2.msra.mxu0 0.0
    %594 = vmatprep.subr.mxu0 0.0
    %595 = vmatpush2.msra.mxu0 0.0
    %596 = vmatprep.subr.mxu0 0.0
    %597 = vmatpush2.msra.mxu0 0.0
    %598 = vmatprep.subr.mxu0 0.0
    %599 = vmatpush2.msra.mxu0 0.0
    %600 = vmatprep.subr.mxu0 0.0
    %601 = vmatpush2.msra.mxu0 0.0
    %602 = vmatprep.subr.mxu0 0.0
    %603 = vmatpush2.msra.mxu0 0.0
    %604 = vmatprep.subr.mxu0 0.0
    %605 = vmatpush2.msra.mxu0 0.0
    %606 = vmatprep.mubr.f32.mxu0 0.0
    %607 = vmatmul.mubr.f32.gmra.mxu0 %v540
    %v608 = vpop.f32.mrf.mxu0
    %v609 = vadd.f32 0.0, %v608
    %v610 = vpop.f32.mrf.mxu0
    %611 = vdwg.mxu0
    %v612 = vadd.f32 %v536, %v609
    %v613 = vxor.u32 %v612, 2147483648
    %v614 = vmul.f32 %v613, 1.442695
    %v615 = vpow.pop %v614
    %v616 = vadd.f32 %v615, 1.0
    %v617 = vrcp.pop %v616
    %v618 = vmul.f32 1.0, %v617
    %v619 = vtanh.pop %v612
    %v620 = vmul.f32 %v618, %v528
    %622 = vrot.lane.b32.xlu0 %v619, 64
    %v623 = vpop.permute.xlu0 %622
    %v625 = vmul.f32 %v618, %v623
    %627 = vrot.lane.b32.xlu0 %v625, 32
    %v628 = vpop.permute.xlu0 %627
    %v630 = vadd.f32 %v620, %v628
    %v631 = vtanh.pop %v630
    %633 = vrot.lane.b32.xlu0 %v631, 64
    %v634 = vpop.permute.xlu0 %633
    %v636 = vmul.f32 %v618, %v634
    %s637 = scalar_lea.vmem [#allocation2], 32
    %v638 = vld [vmem:[%s637] sm:$0xff]
    %640 = vrot.lane.b32.xlu0 %v636, 32
    %v641 = vpop.permute.xlu0 %640
    %v642 = vsel %vm228, %v641, 0
    %644 = vmatprep.subr.mxu0 0.0
    %645 = vmatpush1.msra.mxu0 0.0
    %646 = vmatprep.subr.mxu0 0.0
    %647 = vmatpush1.msra.mxu0 0.0
    %648 = vmatprep.subr.mxu0 0.0
    %649 = vmatpush1.msra.mxu0 0.0
    %650 = vmatprep.subr.mxu0 0.0
    %651 = vmatpush1.msra.mxu0 0.0
    %652 = vmatprep.subr.mxu0 0.0
    %653 = vmatpush1.msra.mxu0 0.0
    %654 = vmatprep.subr.mxu0 0.0
    %655 = vmatpush1.msra.mxu0 0.0
    %656 = vmatprep.subr.mxu0 0.0
    %657 = vmatpush1.msra.mxu0 0.0
    %658 = vmatprep.subr.mxu0 0.0
    %659 = vmatpush1.msra.mxu0 0.0
    %660 = vmatprep.subr.mxu0 0.0
    %661 = vmatpush1.msra.mxu0 0.0
    %662 = vmatprep.subr.mxu0 0.0
    %663 = vmatpush1.msra.mxu0 0.0
    %664 = vmatprep.subr.mxu0 0.0
    %665 = vmatpush1.msra.mxu0 0.0
    %666 = vmatprep.subr.mxu0 0.0
    %667 = vmatpush1.msra.mxu0 0.0
    %668 = vmatprep.subr.mxu0 0.0
    %669 = vmatpush1.msra.mxu0 %v224
    %670 = vmatprep.subr.mxu0 0.0
    %671 = vmatpush1.msra.mxu0 %v223
    %672 = vmatprep.subr.mxu0 0.0
    %673 = vmatpush1.msra.mxu0 %v222
    %674 = vmatprep.subr.mxu0 0.0
    %675 = vmatpush1.msra.mxu0 %v221
    %676 = vmatprep.subr.mxu0 0.0
    %677 = vmatpush2.msra.mxu0 0.0
    %678 = vmatprep.subr.mxu0 0.0
    %679 = vmatpush2.msra.mxu0 0.0
    %680 = vmatprep.subr.mxu0 0.0
    %681 = vmatpush2.msra.mxu0 0.0
    %682 = vmatprep.subr.mxu0 0.0
    %683 = vmatpush2.msra.mxu0 0.0
    %684 = vmatprep.subr.mxu0 0.0
    %685 = vmatpush2.msra.mxu0 0.0
    %686 = vmatprep.subr.mxu0 0.0
    %687 = vmatpush2.msra.mxu0 0.0
    %688 = vmatprep.subr.mxu0 0.0
    %689 = vmatpush2.msra.mxu0 0.0
    %690 = vmatprep.subr.mxu0 0.0
    %691 = vmatpush2.msra.mxu0 0.0
    %692 = vmatprep.subr.mxu0 0.0
    %693 = vmatpush2.msra.mxu0 0.0
    %694 = vmatprep.subr.mxu0 0.0
    %695 = vmatpush2.msra.mxu0 0.0
    %696 = vmatprep.subr.mxu0 0.0
    %697 = vmatpush2.msra.mxu0 0.0
    %698 = vmatprep.subr.mxu0 0.0
    %699 = vmatpush2.msra.mxu0 0.0
    %700 = vmatprep.subr.mxu0 0.0
    %701 = vmatpush2.msra.mxu0 0.0
    %702 = vmatprep.subr.mxu0 0.0
    %703 = vmatpush2.msra.mxu0 0.0
    %704 = vmatprep.subr.mxu0 0.0
    %705 = vmatpush2.msra.mxu0 0.0
    %706 = vmatprep.subr.mxu0 0.0
    %707 = vmatpush2.msra.mxu0 0.0
    %708 = vmatprep.mubr.f32.mxu0 0.0
    %709 = vmatmul.mubr.f32.gmra.mxu0 %v642
    %v710 = vpop.f32.mrf.mxu0
    %v711 = vadd.f32 0.0, %v710
    %v712 = vpop.f32.mrf.mxu0
    %713 = vdwg.mxu0
    %v714 = vadd.f32 %v638, %v711
    %v715 = vxor.u32 %v714, 2147483648
    %v716 = vmul.f32 %v715, 1.442695
    %v717 = vpow.pop %v716
    %v718 = vadd.f32 %v717, 1.0
    %v719 = vrcp.pop %v718
    %v720 = vmul.f32 1.0, %v719
    %v721 = vtanh.pop %v714
    %v722 = vmul.f32 %v720, %v630
    %724 = vrot.lane.b32.xlu0 %v721, 64
    %v725 = vpop.permute.xlu0 %724
    %v727 = vmul.f32 %v720, %v725
    %729 = vrot.lane.b32.xlu0 %v727, 32
    %v730 = vpop.permute.xlu0 %729
    %v732 = vadd.f32 %v722, %v730
    %v733 = vtanh.pop %v732
    %735 = vrot.lane.b32.xlu0 %v733, 64
    %v736 = vpop.permute.xlu0 %735
    %v738 = vmul.f32 %v720, %v736
    %s739 = scalar_lea.vmem [#allocation2], 40
    %v740 = vld [vmem:[%s739] sm:$0xff]
    %742 = vrot.lane.b32.xlu0 %v738, 32
    %v743 = vpop.permute.xlu0 %742
    %v744 = vsel %vm228, %v743, 0
    %746 = vmatprep.subr.mxu0 0.0
    %747 = vmatpush1.msra.mxu0 0.0
    %748 = vmatprep.subr.mxu0 0.0
    %749 = vmatpush1.msra.mxu0 0.0
    %750 = vmatprep.subr.mxu0 0.0
    %751 = vmatpush1.msra.mxu0 0.0
    %752 = vmatprep.subr.mxu0 0.0
    %753 = vmatpush1.msra.mxu0 0.0
    %754 = vmatprep.subr.mxu0 0.0
    %755 = vmatpush1.msra.mxu0 0.0
    %756 = vmatprep.subr.mxu0 0.0
    %757 = vmatpush1.msra.mxu0 0.0
    %758 = vmatprep.subr.mxu0 0.0
    %759 = vmatpush1.msra.mxu0 0.0
    %760 = vmatprep.subr.mxu0 0.0
    %761 = vmatpush1.msra.mxu0 0.0
    %762 = vmatprep.subr.mxu0 0.0
    %763 = vmatpush1.msra.mxu0 0.0
    %764 = vmatprep.subr.mxu0 0.0
    %765 = vmatpush1.msra.mxu0 0.0
    %766 = vmatprep.subr.mxu0 0.0
    %767 = vmatpush1.msra.mxu0 0.0
    %768 = vmatprep.subr.mxu0 0.0
    %769 = vmatpush1.msra.mxu0 0.0
    %770 = vmatprep.subr.mxu0 0.0
    %771 = vmatpush1.msra.mxu0 %v224
    %772 = vmatprep.subr.mxu0 0.0
    %773 = vmatpush1.msra.mxu0 %v223
    %774 = vmatprep.subr.mxu0 0.0
    %775 = vmatpush1.msra.mxu0 %v222
    %776 = vmatprep.subr.mxu0 0.0
    %777 = vmatpush1.msra.mxu0 %v221
    %778 = vmatprep.subr.mxu0 0.0
    %779 = vmatpush2.msra.mxu0 0.0
    %780 = vmatprep.subr.mxu0 0.0
    %781 = vmatpush2.msra.mxu0 0.0
    %782 = vmatprep.subr.mxu0 0.0
    %783 = vmatpush2.msra.mxu0 0.0
    %784 = vmatprep.subr.mxu0 0.0
    %785 = vmatpush2.msra.mxu0 0.0
    %786 = vmatprep.subr.mxu0 0.0
    %787 = vmatpush2.msra.mxu0 0.0
    %788 = vmatprep.subr.mxu0 0.0
    %789 = vmatpush2.msra.mxu0 0.0
    %790 = vmatprep.subr.mxu0 0.0
    %791 = vmatpush2.msra.mxu0 0.0
    %792 = vmatprep.subr.mxu0 0.0
    %793 = vmatpush2.msra.mxu0 0.0
    %794 = vmatprep.subr.mxu0 0.0
    %795 = vmatpush2.msra.mxu0 0.0
    %796 = vmatprep.subr.mxu0 0.0
    %797 = vmatpush2.msra.mxu0 0.0
    %798 = vmatprep.subr.mxu0 0.0
    %799 = vmatpush2.msra.mxu0 0.0
    %800 = vmatprep.subr.mxu0 0.0
    %801 = vmatpush2.msra.mxu0 0.0
    %802 = vmatprep.subr.mxu0 0.0
    %803 = vmatpush2.msra.mxu0 0.0
    %804 = vmatprep.subr.mxu0 0.0
    %805 = vmatpush2.msra.mxu0 0.0
    %806 = vmatprep.subr.mxu0 0.0
    %807 = vmatpush2.msra.mxu0 0.0
    %808 = vmatprep.subr.mxu0 0.0
    %809 = vmatpush2.msra.mxu0 0.0
    %810 = vmatprep.mubr.f32.mxu0 0.0
    %811 = vmatmul.mubr.f32.gmra.mxu0 %v744
    %v812 = vpop.f32.mrf.mxu0
    %v813 = vadd.f32 0.0, %v812
    %v814 = vpop.f32.mrf.mxu0
    %815 = vdwg.mxu0
    %v816 = vadd.f32 %v740, %v813
    %v817 = vxor.u32 %v816, 2147483648
    %v818 = vmul.f32 %v817, 1.442695
    %v819 = vpow.pop %v818
    %v820 = vadd.f32 %v819, 1.0
    %v821 = vrcp.pop %v820
    %v822 = vmul.f32 1.0, %v821
    %v823 = vtanh.pop %v816
    %v824 = vmul.f32 %v822, %v732
    %826 = vrot.lane.b32.xlu0 %v823, 64
    %v827 = vpop.permute.xlu0 %826
    %v829 = vmul.f32 %v822, %v827
    %831 = vrot.lane.b32.xlu0 %v829, 32
    %v832 = vpop.permute.xlu0 %831
    %v834 = vadd.f32 %v824, %v832
    %v835 = vtanh.pop %v834
    %837 = vrot.lane.b32.xlu0 %v835, 64
    %v838 = vpop.permute.xlu0 %837
    %v840 = vmul.f32 %v822, %v838
    %s841 = scalar_lea.vmem [#allocation2], 48
    %v842 = vld [vmem:[%s841] sm:$0xff]
    %844 = vrot.lane.b32.xlu0 %v840, 32
    %v845 = vpop.permute.xlu0 %844
    %v846 = vsel %vm228, %v845, 0
    %848 = vmatprep.subr.mxu0 0.0
    %849 = vmatpush1.msra.mxu0 0.0
    %850 = vmatprep.subr.mxu0 0.0
    %851 = vmatpush1.msra.mxu0 0.0
    %852 = vmatprep.subr.mxu0 0.0
    %853 = vmatpush1.msra.mxu0 0.0
    %854 = vmatprep.subr.mxu0 0.0
    %855 = vmatpush1.msra.mxu0 0.0
    %856 = vmatprep.subr.mxu0 0.0
    %857 = vmatpush1.msra.mxu0 0.0
    %858 = vmatprep.subr.mxu0 0.0
    %859 = vmatpush1.msra.mxu0 0.0
    %860 = vmatprep.subr.mxu0 0.0
    %861 = vmatpush1.msra.mxu0 0.0
    %862 = vmatprep.subr.mxu0 0.0
    %863 = vmatpush1.msra.mxu0 0.0
    %864 = vmatprep.subr.mxu0 0.0
    %865 = vmatpush1.msra.mxu0 0.0
    %866 = vmatprep.subr.mxu0 0.0
    %867 = vmatpush1.msra.mxu0 0.0
    %868 = vmatprep.subr.mxu0 0.0
    %869 = vmatpush1.msra.mxu0 0.0
    %870 = vmatprep.subr.mxu0 0.0
    %871 = vmatpush1.msra.mxu0 0.0
    %872 = vmatprep.subr.mxu0 0.0
    %873 = vmatpush1.msra.mxu0 %v224
    %874 = vmatprep.subr.mxu0 0.0
    %875 = vmatpush1.msra.mxu0 %v223
    %876 = vmatprep.subr.mxu0 0.0
    %877 = vmatpush1.msra.mxu0 %v222
    %878 = vmatprep.subr.mxu0 0.0
    %879 = vmatpush1.msra.mxu0 %v221
    %880 = vmatprep.subr.mxu0 0.0
    %881 = vmatpush2.msra.mxu0 0.0
    %882 = vmatprep.subr.mxu0 0.0
    %883 = vmatpush2.msra.mxu0 0.0
    %884 = vmatprep.subr.mxu0 0.0
    %885 = vmatpush2.msra.mxu0 0.0
    %886 = vmatprep.subr.mxu0 0.0
    %887 = vmatpush2.msra.mxu0 0.0
    %888 = vmatprep.subr.mxu0 0.0
    %889 = vmatpush2.msra.mxu0 0.0
    %890 = vmatprep.subr.mxu0 0.0
    %891 = vmatpush2.msra.mxu0 0.0
    %892 = vmatprep.subr.mxu0 0.0
    %893 = vmatpush2.msra.mxu0 0.0
    %894 = vmatprep.subr.mxu0 0.0
    %895 = vmatpush2.msra.mxu0 0.0
    %896 = vmatprep.subr.mxu0 0.0
    %897 = vmatpush2.msra.mxu0 0.0
    %898 = vmatprep.subr.mxu0 0.0
    %899 = vmatpush2.msra.mxu0 0.0
    %900 = vmatprep.subr.mxu0 0.0
    %901 = vmatpush2.msra.mxu0 0.0
    %902 = vmatprep.subr.mxu0 0.0
    %903 = vmatpush2.msra.mxu0 0.0
    %904 = vmatprep.subr.mxu0 0.0
    %905 = vmatpush2.msra.mxu0 0.0
    %906 = vmatprep.subr.mxu0 0.0
    %907 = vmatpush2.msra.mxu0 0.0
    %908 = vmatprep.subr.mxu0 0.0
    %909 = vmatpush2.msra.mxu0 0.0
    %910 = vmatprep.subr.mxu0 0.0
    %911 = vmatpush2.msra.mxu0 0.0
    %912 = vmatprep.mubr.f32.mxu0 0.0
    %913 = vmatmul.mubr.f32.gmra.mxu0 %v846
    %v914 = vpop.f32.mrf.mxu0
    %v915 = vadd.f32 0.0, %v914
    %v916 = vpop.f32.mrf.mxu0
    %917 = vdwg.mxu0
    %v918 = vadd.f32 %v842, %v915
    %v919 = vxor.u32 %v918, 2147483648
    %v920 = vmul.f32 %v919, 1.442695
    %v921 = vpow.pop %v920
    %v922 = vadd.f32 %v921, 1.0
    %v923 = vrcp.pop %v922
    %v924 = vmul.f32 1.0, %v923
    %v925 = vtanh.pop %v918
    %v926 = vmul.f32 %v924, %v834
    %928 = vrot.lane.b32.xlu0 %v925, 64
    %v929 = vpop.permute.xlu0 %928
    %v931 = vmul.f32 %v924, %v929
    %933 = vrot.lane.b32.xlu0 %v931, 32
    %v934 = vpop.permute.xlu0 %933
    %v936 = vadd.f32 %v926, %v934
    %v937 = vtanh.pop %v936
    %939 = vrot.lane.b32.xlu0 %v937, 64
    %v940 = vpop.permute.xlu0 %939
    %v942 = vmul.f32 %v924, %v940
    %s943 = scalar_lea.vmem [#allocation2], 56
    %v944 = vld [vmem:[%s943] sm:$0xff]
    %946 = vrot.lane.b32.xlu0 %v942, 32
    %v947 = vpop.permute.xlu0 %946
    %v948 = vsel %vm228, %v947, 0
    %950 = vmatprep.subr.mxu0 0.0
    %951 = vmatpush1.msra.mxu0 0.0
    %952 = vmatprep.subr.mxu0 0.0
    %953 = vmatpush1.msra.mxu0 0.0
    %954 = vmatprep.subr.mxu0 0.0
    %955 = vmatpush1.msra.mxu0 0.0
    %956 = vmatprep.subr.mxu0 0.0
    %957 = vmatpush1.msra.mxu0 0.0
    %958 = vmatprep.subr.mxu0 0.0
    %959 = vmatpush1.msra.mxu0 0.0
    %960 = vmatprep.subr.mxu0 0.0
    %961 = vmatpush1.msra.mxu0 0.0
    %962 = vmatprep.subr.mxu0 0.0
    %963 = vmatpush1.msra.mxu0 0.0
    %964 = vmatprep.subr.mxu0 0.0
    %965 = vmatpush1.msra.mxu0 0.0
    %966 = vmatprep.subr.mxu0 0.0
    %967 = vmatpush1.msra.mxu0 0.0
    %968 = vmatprep.subr.mxu0 0.0
    %969 = vmatpush1.msra.mxu0 0.0
    %970 = vmatprep.subr.mxu0 0.0
    %971 = vmatpush1.msra.mxu0 0.0
    %972 = vmatprep.subr.mxu0 0.0
    %973 = vmatpush1.msra.mxu0 0.0
    %974 = vmatprep.subr.mxu0 0.0
    %975 = vmatpush1.msra.mxu0 %v224
    %976 = vmatprep.subr.mxu0 0.0
    %977 = vmatpush1.msra.mxu0 %v223
    %978 = vmatprep.subr.mxu0 0.0
    %979 = vmatpush1.msra.mxu0 %v222
    %980 = vmatprep.subr.mxu0 0.0
    %981 = vmatpush1.msra.mxu0 %v221
    %982 = vmatprep.subr.mxu0 0.0
    %983 = vmatpush2.msra.mxu0 0.0
    %984 = vmatprep.subr.mxu0 0.0
    %985 = vmatpush2.msra.mxu0 0.0
    %986 = vmatprep.subr.mxu0 0.0
    %987 = vmatpush2.msra.mxu0 0.0
    %988 = vmatprep.subr.mxu0 0.0
    %989 = vmatpush2.msra.mxu0 0.0
    %990 = vmatprep.subr.mxu0 0.0
    %991 = vmatpush2.msra.mxu0 0.0
    %992 = vmatprep.subr.mxu0 0.0
    %993 = vmatpush2.msra.mxu0 0.0
    %994 = vmatprep.subr.mxu0 0.0
    %995 = vmatpush2.msra.mxu0 0.0
    %996 = vmatprep.subr.mxu0 0.0
    %997 = vmatpush2.msra.mxu0 0.0
    %998 = vmatprep.subr.mxu0 0.0
    %999 = vmatpush2.msra.mxu0 0.0
    %1000 = vmatprep.subr.mxu0 0.0
    %1001 = vmatpush2.msra.mxu0 0.0
    %1002 = vmatprep.subr.mxu0 0.0
    %1003 = vmatpush2.msra.mxu0 0.0
    %1004 = vmatprep.subr.mxu0 0.0
    %1005 = vmatpush2.msra.mxu0 0.0
    %1006 = vmatprep.subr.mxu0 0.0
    %1007 = vmatpush2.msra.mxu0 0.0
    %1008 = vmatprep.subr.mxu0 0.0
    %1009 = vmatpush2.msra.mxu0 0.0
    %1010 = vmatprep.subr.mxu0 0.0
    %1011 = vmatpush2.msra.mxu0 0.0
    %1012 = vmatprep.subr.mxu0 0.0
    %1013 = vmatpush2.msra.mxu0 0.0
    %1014 = vmatprep.mubr.f32.mxu0 0.0
    %1015 = vmatmul.mubr.f32.gmra.mxu0 %v948
    %v1016 = vpop.f32.mrf.mxu0
    %v1017 = vadd.f32 0.0, %v1016
    %v1018 = vpop.f32.mrf.mxu0
    %1019 = vdwg.mxu0
    %v1020 = vadd.f32 %v944, %v1017
    %v1021 = vxor.u32 %v1020, 2147483648
    %v1022 = vmul.f32 %v1021, 1.442695
    %v1023 = vpow.pop %v1022
    %v1024 = vadd.f32 %v1023, 1.0
    %v1025 = vrcp.pop %v1024
    %v1026 = vmul.f32 1.0, %v1025
    %v1027 = vtanh.pop %v1020
    %v1028 = vmul.f32 %v1026, %v936
    %1030 = vrot.lane.b32.xlu0 %v1027, 64
    %v1031 = vpop.permute.xlu0 %1030
    %v1033 = vmul.f32 %v1026, %v1031
    %1035 = vrot.lane.b32.xlu0 %v1033, 32
    %v1036 = vpop.permute.xlu0 %1035
    %v1038 = vadd.f32 %v1028, %v1036
    %v1039 = vtanh.pop %v1038
    %1041 = vrot.lane.b32.xlu0 %v1039, 64
    %v1042 = vpop.permute.xlu0 %1041
    %v1044 = vmul.f32 %v1026, %v1042
    %1046 = vrot.lane.b32.xlu0 %v1044, 32
    %v1047 = vpop.permute.xlu0 %1046
    %1049 = vst.msk [vmem:[#allocation3] sm:$0xff] %vm228, %v1047
    %1051 = vrot.lane.b32.xlu0 %v1038, 96
    %v1052 = vpop.permute.xlu0 %1051
    %1054 = vst.msk [vmem:[#allocation4] sm:$0xff] %vm228, %v1052
    // Predicated region
    $region34: #{tpu_custom_call.1} parent=1 // pred_check
      %p1055 = pneg %p59
    $region35: #{tpu_custom_call.1} parent=1 // pred_check_branch
      %1057 = sbr.rel (%p1055) target = $region37
    $region36: #{tpu_custom_call.1} parent=1 // pred_region
      %1058 = vst.msk [vmem:[#allocation11] sm:$0xff] %vm228, %v1047
    $region37: #{tpu_custom_call.1} parent=1 // pred_fallthru
      _
    // Predicated region
    $region38: #{tpu_custom_call.1} parent=1 // pred_check
      _
    $region39: #{tpu_custom_call.1} parent=1 // pred_check_branch
      %1060 = sbr.rel (0) target = $region41
    $region40: #{tpu_custom_call.1} parent=1 // pred_region
      %s1062 = ssub.s32 128, 128
      %1063 = vsyncadd [#allocation7], %s1062
      %s1065 = sshll.u32 [#allocation11], 4
      %s1066 = int_to_ptr.vmem [resolvable:$true] %s1065
      %1068 = dma.vmem_to_hbm [thread:$0]  %s1066, 128, %s4, [#allocation7]
    $region41: #{tpu_custom_call.1} parent=1 // pred_fallthru
      _
    // Predicated region
    $region42: #{tpu_custom_call.1} parent=1 // pred_check
      _
    $region43: #{tpu_custom_call.1} parent=1 // pred_check_branch
      %1070 = sbr.rel (0) target = $region45
    $region44: #{tpu_custom_call.1} parent=1 // pred_region
      %1071 = dma.done [#allocation7], 128
    $region45: #{tpu_custom_call.1} parent=1 // pred_fallthru
      _
    %1072 = vsyncpa [#allocation6], 1
    %1073 = vsyncpa [#allocation9], 1
    %1074 = vsyncpa [#allocation7], 1

</llo_original>
